<compile_context>
chip_gen: v5e
topology: v5e:2x2
jax: 0.10.0
libtpu: 0.0.40
codegen_flags: <defaults>
</compile_context>

<pallas_src>
import functools

import numpy as np
import jax
import jax.numpy as jnp
from jax import lax
from jax.experimental import pallas as pl
from jax.experimental.pallas import tpu as pltpu

BN_EPS = 1e-5
NEG_SLOPE = 0.1


def _vmem_limit_bytes():
    cap = 64 * 1024 * 1024                      # conservative fallback
    try:
        cap = int(getattr(pltpu.get_tpu_info(), "vmem_capacity_bytes", cap))
    except Exception:
        pass
    return int(min(96 * 1024 * 1024, (cap * 3) // 4))


def _round_up(x, m):
    return ((x + m - 1) // m) * m


def _largest_divisor_at_most(n, cap):
    best = 1
    for d in range(1, n + 1):
        if n % d == 0 and d <= cap:
            best = d
    return best


# ---------------------------------------------------------------------------
# Pass 1: conv as 4 accumulating MXU dots over row-sliced cells + BN statistics
# ---------------------------------------------------------------------------
def _conv_stats_kernel(x_ref, w_ref, mask_ref, y_ref, sum_ref, ssq_ref,
                       sum_acc, ssq_acc, *, bcols):
    # x_ref:    (R, F)        bf16  flattened, zero-padded cell rows of one image
    # w_ref:    (4, Cout, F)  bf16  one (Cout, F) slab per half-kernel tap (di, dj)
    # mask_ref: (1, Mp)       f32   1.0 on valid output positions, 0.0 on halo/pad
    # y_ref:    (Cout, Mp)    bf16  conv output, channel-major, lane-dense
    # sum_ref/ssq_ref: (Cout, 1) f32  per-stats-group partials (written once)
    # sum_acc/ssq_acc: (Cout, 1) f32  VMEM scratch accumulators
    mp = y_ref.shape[-1]

    # 4 accumulating MXU matmuls over unit-stride row slices -- no reshape,
    # no relayout, no dtype bounce.
    acc = None
    for di in range(2):
        for dj in range(2):
            off = di * bcols + dj
            patch = x_ref[off:off + mp, :]                     # (Mp, F) bf16
            part = lax.dot_general(
                w_ref[di * 2 + dj], patch,
                dimension_numbers=(((1,), (1,)), ((), ())),    # (Cout,F).(Mp,F)^T
                preferred_element_type=jnp.float32)
            acc = part if acc is None else acc + part
    # TODO(synk): for layers with 4*Cin << 128, a single fused dot over an
    # in-VMEM concatenation of the 4 patches (K = 16*Cin) would use the MXU better.

    # Conv bias intentionally omitted: training-mode BatchNorm's mean
    # subtraction cancels it exactly (reinstate for running-stats/eval mode).
    y_ref[...] = acc.astype(y_ref.dtype)                       # bf16 intermediate

    # Per-channel sum / sum-of-squares over the *valid* positions only
    # (halo column/row and the 128-alignment tail are masked out).
    accv = acc * mask_ref[...]

    @pl.when(pl.program_id(1) == 0)
    def _():
        sum_acc[...] = jnp.zeros_like(sum_acc)
        ssq_acc[...] = jnp.zeros_like(ssq_acc)

    sum_acc[...] += jnp.sum(accv, axis=1, keepdims=True)
    ssq_acc[...] += jnp.sum(accv * accv, axis=1, keepdims=True)

    @pl.when(pl.program_id(1) == pl.num_programs(1) - 1)
    def _():
        sum_ref[...] = sum_acc[...]
        ssq_ref[...] = ssq_acc[...]


# ---------------------------------------------------------------------------
# Pass 2: streaming y * scale + shift, fused LeakyReLU(0.1)
# ---------------------------------------------------------------------------
def _bn_lrelu_kernel(y_ref, scale_ref, shift_ref, o_ref):
    # y_ref: (G, Cout, Mp) bf16; scale/shift: (Cout, 1) f32; o_ref: (G, Cout, Mp) f32
    z = y_ref[...].astype(jnp.float32) * scale_ref[...] + shift_ref[...]
    o_ref[...] = jnp.maximum(z, NEG_SLOPE * z)


# ---------------------------------------------------------------------------
# Wrapper-side layout transforms (no input duplication)
# ---------------------------------------------------------------------------
def _space_to_depth_flat(x_nchw, pad, rows):
    """(N,Cin,H,W) -> (N, rows, 4*Cin): stride-2 space-to-depth cells, flattened
    row-major over the (OH+1, OW+1) cell grid and zero-padded to `rows`."""
    n, c, h, w = x_nchw.shape
    xp = jnp.pad(x_nchw, ((0, 0), (0, 0), (pad, pad), (pad, pad)))
    hp, wp = h + 2 * pad, w + 2 * pad
    a, b = hp // 2, wp // 2
    xr = jnp.transpose(xp, (0, 2, 3, 1)).reshape(n, a, 2, b, 2, c)
    xr = jnp.transpose(xr, (0, 1, 3, 2, 4, 5))             # (N, A, B, p, q, C)
    cells = xr.reshape(n, a * b, 4 * c)
    return jnp.pad(cells, ((0, 0), (0, rows - a * b), (0, 0)))


def _weights_to_tap_slabs(conv_w):
    """(Cout,Cin,4,4) -> (4, Cout, 4*Cin): slab[2di+dj][co,(p,q,c)] = W[co,c,2di+p,2dj+q]."""
    cout, cin, _, _ = conv_w.shape
    wr = conv_w.reshape(cout, cin, 2, 2, 2, 2)              # (co, c, di, p, dj, q)
    wr = jnp.transpose(wr, (2, 4, 0, 3, 5, 1))              # (di, dj, co, p, q, c)
    return wr.reshape(4, cout, 4 * cin)


@functools.partial(jax.jit, static_argnames=("kernel_size", "stride", "padding"))
def downsample_block(x_nchw, conv_w, conv_b, bn_gamma, bn_beta,
                     kernel_size=4, stride=2, padding=1):
    """x_nchw: (N,Cin,H,W); conv_w: (Cout,Cin,KH,KW) (PyTorch layouts/semantics)."""
    del conv_b  # exactly cancelled by training-mode BatchNorm mean subtraction
    assert (kernel_size, stride, padding) == (4, 2, 1), \
        "kernel specialized to the DownsampleBlock defaults (k=4, s=2, p=1)"
    n, cin, h, w = x_nchw.shape
    assert h % 2 == 0 and w % 2 == 0
    cout = conv_w.shape[0]
    oh, ow = h // 2, w // 2
    a, b = oh + 1, ow + 1                  # cell grid incl. one halo row/column
    f = 4 * cin
    mp = _round_up(max(a * b, 128), 128)   # lane-dense matmul/store width
    rows = mp + 2 * b                      # row budget: max slice end = mp + b + 1
    m_total = n * oh * ow
    vmem_limit = _vmem_limit_bytes()

    # v7x megacore: 2 stats groups -> each TensorCore owns half the batch.
    n_groups = 2 if (n % 2 == 0 and n >= 2) else 1
    ipg = n // n_groups

    x_flat = _space_to_depth_flat(x_nchw, padding, rows).astype(jnp.bfloat16)
    w_slabs = _weights_to_tap_slabs(conv_w).astype(jnp.bfloat16)

    # Valid-position mask over the padded width: position m = i*B + j is valid
    # iff i < OH and j < OW (halo column/row and 128-pad tail are excluded).
    m_idx = np.arange(mp)
    valid = (m_idx < oh * b) & (m_idx % b != b - 1)
    mask = jnp.asarray(valid.reshape(1, mp).astype(np.float32))

    cost1 = pl.CostEstimate(
        flops=2 * 4 * cout * f * mp * n,
        transcendentals=0,
        bytes_accessed=(x_flat.size * 2 + w_slabs.size * 2 + mask.size * 4
                        + n * cout * mp * 2 + 2 * n_groups * cout * 4))

    # ---- pass 1: conv (4 accumulating MXU dots) + per-group BN statistics ----
    # TODO(synk): for very large images (x/y blocks approaching the VMEM limit),
    # additionally tile the cell rows within each image (halo of B rows per tile).
    y_bf16, part_sum, part_ssq = pl.pallas_call(
        functools.partial(_conv_stats_kernel, bcols=b),
        out_shape=(
            jax.ShapeDtypeStruct((n, cout, mp), jnp.bfloat16),
            jax.ShapeDtypeStruct((n_groups, cout, 1), jnp.float32),
            jax.ShapeDtypeStruct((n_groups, cout, 1), jnp.float32),
        ),
        grid=(n_groups, ipg),
        in_specs=[
            pl.BlockSpec((None, rows, f), lambda g, t: (g * ipg + t, 0, 0)),
            pl.BlockSpec((4, cout, f), lambda g, t: (0, 0, 0)),
            pl.BlockSpec((1, mp), lambda g, t: (0, 0)),
        ],
        out_specs=(
            pl.BlockSpec((None, cout, mp), lambda g, t: (g * ipg + t, 0, 0)),
            pl.BlockSpec((None, cout, 1), lambda g, t: (g, 0, 0)),
            pl.BlockSpec((None, cout, 1), lambda g, t: (g, 0, 0)),
        ),
        scratch_shapes=[pltpu.VMEM((cout, 1), jnp.float32),
                        pltpu.VMEM((cout, 1), jnp.float32)],
        compiler_params=pltpu.CompilerParams(
            dimension_semantics=("parallel", "arbitrary"),
            vmem_limit_bytes=vmem_limit),
        cost_estimate=cost1,
    )(x_flat, w_slabs, mask)

    # ---- fold global stats into per-channel scale/shift (tiny, done once) ----
    ch_sum = jnp.sum(part_sum, axis=0)                       # (Cout, 1)
    ch_ssq = jnp.sum(part_ssq, axis=0)
    mean = ch_sum / m_total
    # E[x^2]-E[x]^2 in f32; clamp >=0 to guard against cancellation.
    # TODO(synk): Welford-style per-group centered moments for very large N*OH*OW.
    var = jnp.maximum(ch_ssq / m_total - mean * mean, 0.0)
    scale = bn_gamma.reshape(cout, 1).astype(jnp.float32) * lax.rsqrt(var + BN_EPS)
    shift = bn_beta.reshape(cout, 1).astype(jnp.float32) - mean * scale

    # ---- pass 2: streaming normalize + LeakyReLU, several images per step ----
    per_img_bytes = cout * mp * (2 + 4)
    g2 = _largest_divisor_at_most(
        n, max(1, (8 * 1024 * 1024) // max(per_img_bytes, 1)))
    cost2 = pl.CostEstimate(
        flops=3 * n * cout * mp, transcendentals=0,
        bytes_accessed=n * cout * mp * (2 + 4) + 2 * cout * 4)
    out_full = pl.pallas_call(
        _bn_lrelu_kernel,
        out_shape=jax.ShapeDtypeStruct((n, cout, mp), jnp.float32),
        grid=(n // g2,),
        in_specs=[
            pl.BlockSpec((g2, cout, mp), lambda i: (i, 0, 0)),
            pl.BlockSpec((cout, 1), lambda i: (0, 0)),
            pl.BlockSpec((cout, 1), lambda i: (0, 0)),
        ],
        out_specs=pl.BlockSpec((g2, cout, mp), lambda i: (i, 0, 0)),
        compiler_params=pltpu.CompilerParams(
            dimension_semantics=("parallel",),
            vmem_limit_bytes=vmem_limit),
        cost_estimate=cost2,
    )(y_bf16, scale, shift)

    # Crop the halo column/row and the 128-alignment tail; result is NCHW.
    return out_full[:, :, :a * b].reshape(n, cout, a, b)[:, :, :oh, :ow]


# ---------------------------------------------------------------------------
# Pure-JAX reference (f32, includes the conv bias; training-mode BN cancels it)
# ---------------------------------------------------------------------------
def _reference(x, wts, bias, gamma, beta):
    y = lax.conv_general_dilated(x, wts, window_strides=(2, 2),
                                 padding=((1, 1), (1, 1)),
                                 dimension_numbers=("NCHW", "OIHW", "NCHW"))
    y = y + bias[None, :, None, None]
    mean = jnp.mean(y, axis=(0, 2, 3), keepdims=True)
    var = jnp.mean(jnp.square(y - mean), axis=(0, 2, 3), keepdims=True)
    z = (y - mean) * lax.rsqrt(var + BN_EPS)
    z = z * gamma[None, :, None, None] + beta[None, :, None, None]
    return jnp.where(z >= 0, z, NEG_SLOPE * z)


if __name__ == "__main__":
    key = jax.random.PRNGKey(0)
    k_x, k_w, k_b = jax.random.split(key, 3)

    N, CIN, H, W = 2, 4, 16, 16
    COUT, K = 8, 4

    x = jax.random.normal(k_x, (N, CIN, H, W), dtype=jnp.float32)

    fan_in = CIN * K * K
    conv_w = jax.random.normal(k_w, (COUT, CIN, K, K), dtype=jnp.float32) * (fan_in ** -0.5)
    conv_b = jax.random.normal(k_b, (COUT,), dtype=jnp.float32) * (fan_in ** -0.5)
    bn_gamma = jnp.ones((COUT,), dtype=jnp.float32)   # nn.BatchNorm2d default init
    bn_beta = jnp.zeros((COUT,), dtype=jnp.float32)

    out = downsample_block(x, conv_w, conv_b, bn_gamma, bn_beta)
    jax.block_until_ready(out)
    assert out.shape == (N, COUT, H // 2, W // 2), out.shape

    ref = _reference(x, conv_w, conv_b, bn_gamma, bn_beta)
    max_err = float(jnp.max(jnp.abs(out - ref)))
    assert max_err < 0.1, f"max abs error vs f32 reference: {max_err}"

    print("KERNEL_OK")
</pallas_src>

<mosaic_0001>
module attributes {stable_mosaic.version = 11 : i64} {
  func.func @_conv_stats_kernel(%arg0: i32, %arg1: i32, %arg2: memref<1x146x16xbf16, #tpu.memory_space<vmem>>, %arg3: memref<4x8x16xbf16, #tpu.memory_space<vmem>>, %arg4: memref<1x128xf32, #tpu.memory_space<vmem>>, %arg5: memref<1x8x128xbf16, #tpu.memory_space<vmem>>, %arg6: memref<1x8x1xf32, #tpu.memory_space<vmem>>, %arg7: memref<1x8x1xf32, #tpu.memory_space<vmem>>, %arg8: memref<8x1xf32, #tpu.memory_space<vmem>>, %arg9: memref<8x1xf32, #tpu.memory_space<vmem>>) attributes {dimension_semantics = [#tpu.dimension_semantics<parallel>, #tpu.dimension_semantics<arbitrary>], iteration_bounds = array<i64: 2, 1>, scalar_prefetch = 0 : i64, scratch_operands = 2 : i64, tpu.core_type = #tpu.core_type<tc>, window_params = [{transform_indices = @transform_0, window_bounds = array<i64: 1, 146, 16>}, {pipeline_mode = #tpu.pipeline_mode<synchronous>, transform_indices = @transform_1, window_bounds = array<i64: 4, 8, 16>}, {pipeline_mode = #tpu.pipeline_mode<synchronous>, transform_indices = @transform_2, window_bounds = array<i64: 1, 128>}, {transform_indices = @transform_3, window_bounds = array<i64: 1, 8, 128>}, {transform_indices = @transform_4, window_bounds = array<i64: 1, 8, 1>}, {transform_indices = @transform_5, window_bounds = array<i64: 1, 8, 1>}]} {
    %c0 = arith.constant 0 : index
    %c0_0 = arith.constant 0 : index
    %c0_1 = arith.constant 0 : index
    %0 = vector.load %arg2[%c0, %c0_0, %c0_1] : memref<1x146x16xbf16, #tpu.memory_space<vmem>>, vector<1x128x16xbf16>
    %1 = vector.shape_cast %0 : vector<1x128x16xbf16> to vector<128x16xbf16>
    %c0_2 = arith.constant 0 : index
    %c0_3 = arith.constant 0 : index
    %c0_4 = arith.constant 0 : index
    %2 = vector.load %arg3[%c0_2, %c0_3, %c0_4] : memref<4x8x16xbf16, #tpu.memory_space<vmem>>, vector<1x8x16xbf16>
    %3 = vector.shape_cast %2 : vector<1x8x16xbf16> to vector<8x16xbf16>
    %cst = arith.constant dense<0.000000e+00> : vector<8x128xf32>
    %4 = tpu.matmul %3, %1, %cst {dimension_numbers = #tpu.dot_dimension_numbers<[1], [1], [0], [0], [0, 0, 1, 0], [], []>} : vector<8x16xbf16>, vector<128x16xbf16>, vector<8x128xf32> -> vector<8x128xf32>
    %c0_5 = arith.constant 0 : index
    %c1 = arith.constant 1 : index
    %c0_6 = arith.constant 0 : index
    %5 = vector.load %arg2[%c0_5, %c1, %c0_6] : memref<1x146x16xbf16, #tpu.memory_space<vmem>>, vector<1x128x16xbf16>
    %6 = vector.shape_cast %5 : vector<1x128x16xbf16> to vector<128x16xbf16>
    %c1_7 = arith.constant 1 : index
    %c0_8 = arith.constant 0 : index
    %c0_9 = arith.constant 0 : index
    %7 = vector.load %arg3[%c1_7, %c0_8, %c0_9] : memref<4x8x16xbf16, #tpu.memory_space<vmem>>, vector<1x8x16xbf16>
    %8 = vector.shape_cast %7 : vector<1x8x16xbf16> to vector<8x16xbf16>
    %cst_10 = arith.constant dense<0.000000e+00> : vector<8x128xf32>
    %9 = tpu.matmul %8, %6, %cst_10 {dimension_numbers = #tpu.dot_dimension_numbers<[1], [1], [0], [0], [0, 0, 1, 0], [], []>} : vector<8x16xbf16>, vector<128x16xbf16>, vector<8x128xf32> -> vector<8x128xf32>
    %10 = arith.addf %4, %9 : vector<8x128xf32>
    %c0_11 = arith.constant 0 : index
    %c9 = arith.constant 9 : index
    %c0_12 = arith.constant 0 : index
    %11 = vector.load %arg2[%c0_11, %c9, %c0_12] : memref<1x146x16xbf16, #tpu.memory_space<vmem>>, vector<1x128x16xbf16>
    %12 = vector.shape_cast %11 : vector<1x128x16xbf16> to vector<128x16xbf16>
    %c2 = arith.constant 2 : index
    %c0_13 = arith.constant 0 : index
    %c0_14 = arith.constant 0 : index
    %13 = vector.load %arg3[%c2, %c0_13, %c0_14] : memref<4x8x16xbf16, #tpu.memory_space<vmem>>, vector<1x8x16xbf16>
    %14 = vector.shape_cast %13 : vector<1x8x16xbf16> to vector<8x16xbf16>
    %cst_15 = arith.constant dense<0.000000e+00> : vector<8x128xf32>
    %15 = tpu.matmul %14, %12, %cst_15 {dimension_numbers = #tpu.dot_dimension_numbers<[1], [1], [0], [0], [0, 0, 1, 0], [], []>} : vector<8x16xbf16>, vector<128x16xbf16>, vector<8x128xf32> -> vector<8x128xf32>
    %16 = arith.addf %10, %15 : vector<8x128xf32>
    %c0_16 = arith.constant 0 : index
    %c10 = arith.constant 10 : index
    %c0_17 = arith.constant 0 : index
    %17 = vector.load %arg2[%c0_16, %c10, %c0_17] : memref<1x146x16xbf16, #tpu.memory_space<vmem>>, vector<1x128x16xbf16>
    %18 = vector.shape_cast %17 : vector<1x128x16xbf16> to vector<128x16xbf16>
    %c3 = arith.constant 3 : index
    %c0_18 = arith.constant 0 : index
    %c0_19 = arith.constant 0 : index
    %19 = vector.load %arg3[%c3, %c0_18, %c0_19] : memref<4x8x16xbf16, #tpu.memory_space<vmem>>, vector<1x8x16xbf16>
    %20 = vector.shape_cast %19 : vector<1x8x16xbf16> to vector<8x16xbf16>
    %cst_20 = arith.constant dense<0.000000e+00> : vector<8x128xf32>
    %21 = tpu.matmul %20, %18, %cst_20 {dimension_numbers = #tpu.dot_dimension_numbers<[1], [1], [0], [0], [0, 0, 1, 0], [], []>} : vector<8x16xbf16>, vector<128x16xbf16>, vector<8x128xf32> -> vector<8x128xf32>
    %22 = arith.addf %16, %21 : vector<8x128xf32>
    %23 = arith.truncf %22 : vector<8x128xf32> to vector<8x128xbf16>
    %c0_21 = arith.constant 0 : index
    %c0_22 = arith.constant 0 : index
    %c0_23 = arith.constant 0 : index
    %24 = vector.load %arg5[%c0_21, %c0_22, %c0_23] : memref<1x8x128xbf16, #tpu.memory_space<vmem>>, vector<1x8x128xbf16>
    %25 = vector.shape_cast %24 : vector<1x8x128xbf16> to vector<8x128xbf16>
    %26 = vector.shape_cast %23 : vector<8x128xbf16> to vector<1x8x128xbf16>
    tpu.vector_store %arg5[%c0_21, %c0_22, %c0_23], %26 {strides = array<i32>} : memref<1x8x128xbf16, #tpu.memory_space<vmem>>, vector<1x8x128xbf16>,
    %c0_24 = arith.constant 0 : index
    %c0_25 = arith.constant 0 : index
    %27 = vector.load %arg4[%c0_24, %c0_25] : memref<1x128xf32, #tpu.memory_space<vmem>>, vector<1x128xf32>
    %28 = vector.broadcast %27 : vector<1x128xf32> to vector<8x128xf32>
    %29 = arith.mulf %22, %28 : vector<8x128xf32>
    %c0_i32 = arith.constant 0 : i32
    %30 = arith.cmpi eq, %arg1, %c0_i32 : i32
    %31 = arith.extui %30 : i1 to i32
    %c0_i32_26 = arith.constant 0 : i32
    %32 = arith.cmpi ne, %31, %c0_i32_26 : i32
    scf.if %32 {
      %cst_39 = arith.constant 0.000000e+00 : f32
      %47 = vector.broadcast %cst_39 : f32 to vector<8x1xf32>
      %c0_40 = arith.constant 0 : index
      %c0_41 = arith.constant 0 : index
      %48 = vector.load %arg8[%c0_40, %c0_41] : memref<8x1xf32, #tpu.memory_space<vmem>>, vector<8x1xf32>
      tpu.vector_store %arg8[%c0_40, %c0_41], %47 {strides = array<i32>} : memref<8x1xf32, #tpu.memory_space<vmem>>, vector<8x1xf32>,
      %cst_42 = arith.constant 0.000000e+00 : f32
      %49 = vector.broadcast %cst_42 : f32 to vector<8x1xf32>
      %c0_43 = arith.constant 0 : index
      %c0_44 = arith.constant 0 : index
      %50 = vector.load %arg9[%c0_43, %c0_44] : memref<8x1xf32, #tpu.memory_space<vmem>>, vector<8x1xf32>
      tpu.vector_store %arg9[%c0_43, %c0_44], %49 {strides = array<i32>} : memref<8x1xf32, #tpu.memory_space<vmem>>, vector<8x1xf32>,
    } else {
    }
    %c0_27 = arith.constant 0 : index
    %c0_28 = arith.constant 0 : index
    %33 = vector.load %arg8[%c0_27, %c0_28] : memref<8x1xf32, #tpu.memory_space<vmem>>, vector<8x1xf32>
    %cst_29 = arith.constant dense<0.000000e+00> : vector<8xf32>
    %34 = vector.multi_reduction <add>, %29, %cst_29 [1] : vector<8x128xf32> to vector<8xf32>
    %35 = vector.shape_cast %34 : vector<8xf32> to vector<8x1xf32>
    %36 = arith.addf %33, %35 : vector<8x1xf32>
    %c0_30 = arith.constant 0 : index
    %c0_31 = arith.constant 0 : index
    %37 = vector.load %arg8[%c0_30, %c0_31] : memref<8x1xf32, #tpu.memory_space<vmem>>, vector<8x1xf32>
    tpu.vector_store %arg8[%c0_30, %c0_31], %36 {strides = array<i32>} : memref<8x1xf32, #tpu.memory_space<vmem>>, vector<8x1xf32>,
    %c0_32 = arith.constant 0 : index
    %c0_33 = arith.constant 0 : index
    %38 = vector.load %arg9[%c0_32, %c0_33] : memref<8x1xf32, #tpu.memory_space<vmem>>, vector<8x1xf32>
    %39 = arith.mulf %29, %29 : vector<8x128xf32>
    %cst_34 = arith.constant dense<0.000000e+00> : vector<8xf32>
    %40 = vector.multi_reduction <add>, %39, %cst_34 [1] : vector<8x128xf32> to vector<8xf32>
    %41 = vector.shape_cast %40 : vector<8xf32> to vector<8x1xf32>
    %42 = arith.addf %38, %41 : vector<8x1xf32>
    %c0_35 = arith.constant 0 : index
    %c0_36 = arith.constant 0 : index
    %43 = vector.load %arg9[%c0_35, %c0_36] : memref<8x1xf32, #tpu.memory_space<vmem>>, vector<8x1xf32>
    tpu.vector_store %arg9[%c0_35, %c0_36], %42 {strides = array<i32>} : memref<8x1xf32, #tpu.memory_space<vmem>>, vector<8x1xf32>,
    %c0_i32_37 = arith.constant 0 : i32
    %44 = arith.cmpi eq, %arg1, %c0_i32_37 : i32
    %45 = arith.extui %44 : i1 to i32
    %c0_i32_38 = arith.constant 0 : i32
    %46 = arith.cmpi ne, %45, %c0_i32_38 : i32
    scf.if %46 {
      %c0_39 = arith.constant 0 : index
      %c0_40 = arith.constant 0 : index
      %47 = vector.load %arg8[%c0_39, %c0_40] : memref<8x1xf32, #tpu.memory_space<vmem>>, vector<8x1xf32>
      %c0_41 = arith.constant 0 : index
      %c0_42 = arith.constant 0 : index
      %c0_43 = arith.constant 0 : index
      %48 = vector.load %arg6[%c0_41, %c0_42, %c0_43] : memref<1x8x1xf32, #tpu.memory_space<vmem>>, vector<1x8x1xf32>
      %49 = vector.shape_cast %48 : vector<1x8x1xf32> to vector<8x1xf32>
      %50 = vector.shape_cast %47 : vector<8x1xf32> to vector<1x8x1xf32>
      tpu.vector_store %arg6[%c0_41, %c0_42, %c0_43], %50 {strides = array<i32>} : memref<1x8x1xf32, #tpu.memory_space<vmem>>, vector<1x8x1xf32>,
      %c0_44 = arith.constant 0 : index
      %c0_45 = arith.constant 0 : index
      %51 = vector.load %arg9[%c0_44, %c0_45] : memref<8x1xf32, #tpu.memory_space<vmem>>, vector<8x1xf32>
      %c0_46 = arith.constant 0 : index
      %c0_47 = arith.constant 0 : index
      %c0_48 = arith.constant 0 : index
      %52 = vector.load %arg7[%c0_46, %c0_47, %c0_48] : memref<1x8x1xf32, #tpu.memory_space<vmem>>, vector<1x8x1xf32>
      %53 = vector.shape_cast %52 : vector<1x8x1xf32> to vector<8x1xf32>
      %54 = vector.shape_cast %51 : vector<8x1xf32> to vector<1x8x1xf32>
      tpu.vector_store %arg7[%c0_46, %c0_47, %c0_48], %54 {strides = array<i32>} : memref<1x8x1xf32, #tpu.memory_space<vmem>>, vector<1x8x1xf32>,
    } else {
    }
    return
  }
  func.func @transform_0(%arg0: i32, %arg1: i32) -> (i32, i32, i32) {
    %c1_i32 = arith.constant 1 : i32
    %0 = arith.muli %arg0, %c1_i32 : i32
    %1 = arith.addi %0, %arg1 : i32
    %c0_i32 = arith.constant 0 : i32
    %c0_i32_0 = arith.constant 0 : i32
    %c0_i32_1 = arith.constant 0 : i32
    return %1, %c0_i32, %c0_i32_0 : i32, i32, i32
  }
  func.func @transform_1(%arg0: i32, %arg1: i32) -> (i32, i32, i32) {
    %c0_i32 = arith.constant 0 : i32
    %c0_i32_0 = arith.constant 0 : i32
    %c0_i32_1 = arith.constant 0 : i32
    %c0_i32_2 = arith.constant 0 : i32
    return %c0_i32, %c0_i32_0, %c0_i32_1 : i32, i32, i32
  }
  func.func @transform_2(%arg0: i32, %arg1: i32) -> (i32, i32) {
    %c0_i32 = arith.constant 0 : i32
    %c0_i32_0 = arith.constant 0 : i32
    %c0_i32_1 = arith.constant 0 : i32
    return %c0_i32, %c0_i32_0 : i32, i32
  }
  func.func @transform_3(%arg0: i32, %arg1: i32) -> (i32, i32, i32) {
    %c1_i32 = arith.constant 1 : i32
    %0 = arith.muli %arg0, %c1_i32 : i32
    %1 = arith.addi %0, %arg1 : i32
    %c0_i32 = arith.constant 0 : i32
    %c0_i32_0 = arith.constant 0 : i32
    %c0_i32_1 = arith.constant 0 : i32
    return %1, %c0_i32, %c0_i32_0 : i32, i32, i32
  }
  func.func @transform_4(%arg0: i32, %arg1: i32) -> (i32, i32, i32) {
    %c0_i32 = arith.constant 0 : i32
    %c0_i32_0 = arith.constant 0 : i32
    %c0_i32_1 = arith.constant 0 : i32
    return %arg0, %c0_i32, %c0_i32_0 : i32, i32, i32
  }
  func.func @transform_5(%arg0: i32, %arg1: i32) -> (i32, i32, i32) {
    %c0_i32 = arith.constant 0 : i32
    %c0_i32_0 = arith.constant 0 : i32
    %c0_i32_1 = arith.constant 0 : i32
    return %arg0, %c0_i32, %c0_i32_0 : i32, i32, i32
  }
}

module attributes {stable_mosaic.version = 11 : i64} {
  func.func @_bn_lrelu_kernel(%arg0: i32, %arg1: memref<2x8x128xbf16, #tpu.memory_space<vmem>>, %arg2: memref<8x1xf32, #tpu.memory_space<vmem>>, %arg3: memref<8x1xf32, #tpu.memory_space<vmem>>, %arg4: memref<2x8x128xf32, #tpu.memory_space<vmem>>) attributes {dimension_semantics = [#tpu.dimension_semantics<parallel>], iteration_bounds = array<i64: 1>, scalar_prefetch = 0 : i64, scratch_operands = 0 : i64, tpu.core_type = #tpu.core_type<tc>, window_params = [{transform_indices = @transform_0, window_bounds = array<i64: 2, 8, 128>}, {pipeline_mode = #tpu.pipeline_mode<synchronous>, transform_indices = @transform_1, window_bounds = array<i64: 8, 1>}, {pipeline_mode = #tpu.pipeline_mode<synchronous>, transform_indices = @transform_2, window_bounds = array<i64: 8, 1>}, {transform_indices = @transform_3, window_bounds = array<i64: 2, 8, 128>}]} {
    %c0 = arith.constant 0 : index
    %c0_0 = arith.constant 0 : index
    %c0_1 = arith.constant 0 : index
    %0 = vector.load %arg1[%c0, %c0_0, %c0_1] : memref<2x8x128xbf16, #tpu.memory_space<vmem>>, vector<2x8x128xbf16>
    %1 = arith.extf %0 : vector<2x8x128xbf16> to vector<2x8x128xf32>
    %c0_2 = arith.constant 0 : index
    %c0_3 = arith.constant 0 : index
    %2 = vector.load %arg2[%c0_2, %c0_3] : memref<8x1xf32, #tpu.memory_space<vmem>>, vector<8x1xf32>
    %3 = vector.shape_cast %2 : vector<8x1xf32> to vector<1x8x1xf32>
    %4 = vector.broadcast %3 : vector<1x8x1xf32> to vector<2x8x128xf32>
    %5 = arith.mulf %1, %4 : vector<2x8x128xf32>
    %c0_4 = arith.constant 0 : index
    %c0_5 = arith.constant 0 : index
    %6 = vector.load %arg3[%c0_4, %c0_5] : memref<8x1xf32, #tpu.memory_space<vmem>>, vector<8x1xf32>
    %7 = vector.shape_cast %6 : vector<8x1xf32> to vector<1x8x1xf32>
    %8 = vector.broadcast %7 : vector<1x8x1xf32> to vector<2x8x128xf32>
    %9 = arith.addf %5, %8 : vector<2x8x128xf32>
    %cst = arith.constant 1.000000e-01 : f32
    %10 = vector.broadcast %cst : f32 to vector<2x8x128xf32>
    %11 = arith.mulf %10, %9 : vector<2x8x128xf32>
    %12 = arith.maximumf %9, %11 : vector<2x8x128xf32>
    %c0_6 = arith.constant 0 : index
    %c0_7 = arith.constant 0 : index
    %c0_8 = arith.constant 0 : index
    %13 = vector.load %arg4[%c0_6, %c0_7, %c0_8] : memref<2x8x128xf32, #tpu.memory_space<vmem>>, vector<2x8x128xf32>
    tpu.vector_store %arg4[%c0_6, %c0_7, %c0_8], %12 {strides = array<i32>} : memref<2x8x128xf32, #tpu.memory_space<vmem>>, vector<2x8x128xf32>,
    return
  }
  func.func @transform_0(%arg0: i32) -> (i32, i32, i32) {
    %c0_i32 = arith.constant 0 : i32
    %c0_i32_0 = arith.constant 0 : i32
    %c0_i32_1 = arith.constant 0 : i32
    return %arg0, %c0_i32, %c0_i32_0 : i32, i32, i32
  }
  func.func @transform_1(%arg0: i32) -> (i32, i32) {
    %c0_i32 = arith.constant 0 : i32
    %c0_i32_0 = arith.constant 0 : i32
    %c0_i32_1 = arith.constant 0 : i32
    return %c0_i32, %c0_i32_0 : i32, i32
  }
  func.func @transform_2(%arg0: i32) -> (i32, i32) {
    %c0_i32 = arith.constant 0 : i32
    %c0_i32_0 = arith.constant 0 : i32
    %c0_i32_1 = arith.constant 0 : i32
    return %c0_i32, %c0_i32_0 : i32, i32
  }
  func.func @transform_3(%arg0: i32) -> (i32, i32, i32) {
    %c0_i32 = arith.constant 0 : i32
    %c0_i32_0 = arith.constant 0 : i32
    %c0_i32_1 = arith.constant 0 : i32
    return %arg0, %c0_i32, %c0_i32_0 : i32, i32, i32
  }
}

</mosaic_0001>

<llo_original>
// kernel: downsample_block.3
$region0: #{downsample_block.3}
  #allocation0 [shape = 'u32[]', space=smem, size = 0x4, offset = 0x4, fixed_abs, tag = 'smem constant byte address 0x4 - core index']
  #allocation1 [shape = 'u32[72,128]{1,0:T(1,128)}', space=vmem, size = 0x9000, scoped, tag = 'internal scratch']
  %s0 = inlined_call_operand.vmem [shape: bf16[2,8,128], index: 0, kind: input, shape index: {}]
  %s1 = inlined_call_operand.vmem [shape: f32[8,1], index: 1, kind: input, shape index: {}]
  %s2 = inlined_call_operand.vmem [shape: f32[8,1], index: 2, kind: input, shape index: {}]
  %s3 = inlined_call_operand.vmem [shape: f32[2,8,128], index: 3, kind: output, shape index: {}]
  %s4 = sld [smem:[#allocation0]]
  $region22: #{downsample_block.3} parent=0
    _
  %s6 = ssub.s32 1, %s4
  %s7 = scalar_select 0, %s6, %s4
  // Predicated region
  $region2: #{downsample_block.3} parent=0 // pred_check
    _
  $region3: #{downsample_block.3} parent=0 // pred_check_branch
    %9 = sbr.rel (0) target = $region5
  $region4: #{downsample_block.3} parent=0 // pred_region
    _
  $region5: #{downsample_block.3} parent=0 // pred_fallthru
    _
  // Predicated region
  $region6: #{downsample_block.3} parent=0 // pred_check
    _
  $region7: #{downsample_block.3} parent=0 // pred_check_branch
    %11 = sbr.rel (0) target = $region9
  $region8: #{downsample_block.3} parent=0 // pred_region
    _
  $region9: #{downsample_block.3} parent=0 // pred_fallthru
    _
  // Predicated region
  $region10: #{downsample_block.3} parent=0 // pred_check
    _
  $region11: #{downsample_block.3} parent=0 // pred_check_branch
    %13 = sbr.rel (0) target = $region13
  $region12: #{downsample_block.3} parent=0 // pred_region
    _
  $region13: #{downsample_block.3} parent=0 // pred_fallthru
    _
  %v14 = vld [vmem:[%s0] sm:$0xf]
  %v15 = vld [vmem:[%s0 + $0x4] sm:$0xf]
  %v16 = vunpack.c.l.bf16 %v14
  %v17 = vunpack.c.l.bf16 %v15
  %v18 = vld [vmem:[%s1] sm:$0xff]
  %20 = vset.pattern.permute.xlu0 0
  %21 = vperm.xlu0 %20, %v18
  %v22 = vpop.permute.xlu0 %21
  %v24 = vmul.f32 %v16, %v22
  %v25 = vmul.f32 %v17, %v22
  %v26 = vld [vmem:[%s2] sm:$0xff]
  %28 = vset.pattern.permute.xlu0 0
  %29 = vperm.xlu0 %28, %v26
  %v30 = vpop.permute.xlu0 %29
  %v32 = vadd.f32 %v24, %v30
  %v33 = vadd.f32 %v25, %v30
  %v34 = vmul.f32 %v32, 0.1
  %v35 = vmul.f32 %v33, 0.1
  %v36 = vmax.f32 %v32, %v34
  %v37 = vmax.f32 %v33, %v35
  %38 = vst [vmem:[%s3] sm:$0xff] %v36
  %39 = vst [vmem:[%s3 + $0x8] sm:$0xff] %v37
  // Predicated region
  $region14: #{downsample_block.3} parent=0 // pred_check
    _
  $region15: #{downsample_block.3} parent=0 // pred_check_branch
    %41 = sbr.rel (0) target = $region17
  $region16: #{downsample_block.3} parent=0 // pred_region
    _
  $region17: #{downsample_block.3} parent=0 // pred_fallthru
    _
  // Predicated region
  $region18: #{downsample_block.3} parent=0 // pred_check
    _
  $region19: #{downsample_block.3} parent=0 // pred_check_branch
    %43 = sbr.rel (0) target = $region21
  $region20: #{downsample_block.3} parent=0 // pred_region
    _
  $region21: #{downsample_block.3} parent=0 // pred_fallthru
    _

// kernel: downsample_block.2
$region0: #{downsample_block.2}
  #allocation0 [shape = 'u32[]', space=smem, size = 0x4, offset = 0x4, fixed_abs, tag = 'smem constant byte address 0x4 - core index']
  #allocation1 [shape = 'u32[72,128]{1,0:T(1,128)}', space=vmem, size = 0x9000, scoped, tag = 'internal scratch']
  #allocation2 [shape = 'f32[8,1]{1,0:T(8,128)}', space=vmem, size = 0x1000, scoped, tag = 'scratch operand']
  #allocation3 [shape = 'f32[8,1]{1,0:T(8,128)}', space=vmem, size = 0x1000, scoped, tag = 'scratch operand']
  %s0 = inlined_call_operand.vmem [shape: bf16[2,146,16], index: 0, kind: input, shape index: {}]
  %s1 = inlined_call_operand.vmem [shape: bf16[4,8,16], index: 1, kind: input, shape index: {}]
  %s2 = inlined_call_operand.vmem [shape: f32[1,128], index: 2, kind: input, shape index: {}]
  %s3 = inlined_call_operand.vmem [shape: bf16[2,8,128], index: 3, kind: output, shape index: {0}]
  %s4 = inlined_call_operand.vmem [shape: f32[2,8,1], index: 4, kind: output, shape index: {1}]
  %s5 = inlined_call_operand.vmem [shape: f32[2,8,1], index: 5, kind: output, shape index: {2}]
  %6 = xla_tuple %s3, %s4, %s5
  %s7 = sld [smem:[#allocation0]]
  $region69: #{downsample_block.2} parent=0
    _
  %s9 = ssub.s32 1, %s7
  %s10 = scalar_select 0, %s9, %s7
  loop: start=0, step=1, limit=4
  $region2: #{downsample_block.2} parent=0 // loop_pre_header
    _
  $region3: #{downsample_block.2} parent=0 // loop_header
    %s12 = sphi 0, %s16
    %p13 = scmp.ge.s32.totalorder %s12, 4
    %s19 = sphi 0, %s31
    %s20 = sphi 0, %s27
    %s21 = sphi 0, %s19
    %s22 = sphi 0, %s20
    %s23 = sphi 0, %s21
    %s24 = sphi 0, %s22
    %s36 = sphi 0, %s38
    %s39 = sphi 0, %s36
    %s40 = sphi 0, %s39
    %s56 = sphi 0, %s40
    %s60 = sphi 0, %s60
    %s62 = sphi 0, %s60
    %s63 = sphi 0, %s62
    %s77 = sphi 0, %s63
    %s81 = sphi 0, %s81
    %s83 = sphi 0, %s81
    %s84 = sphi 0, %s83
    %s98 = sphi 0, %s84
    %s106 = sphi 0, %s108
    %s109 = sphi 0, %s106
    %s110 = sphi 0, %s109
    %s126 = sphi 0, %s110
    %s132 = sphi 0, %s134
    %s135 = sphi 0, %s132
    %s136 = sphi 0, %s135
    %s152 = sphi 0, %s136
    %s158 = sphi 0, %s160
    %s161 = sphi 0, %s158
    %s162 = sphi 0, %s161
    %s178 = sphi 0, %s162
  $region4: #{downsample_block.2} parent=0 // loop_header_branch
    %15 = sbr.rel (%p13) target = $region8
  $region5: #{downsample_block.2} parent=0 // loop_body
    %s17 = ssub.s32 %s12, 1
    %s18 = ssub.s32 %s12, 2
    %s25 = sadd.s32 1, %s20
    %p26 = scmp.ge.s32.totalorder %s25, 1
    %s27 = scalar_select %p26, 0, %s25
    %s28 = sadd.s32 1, %s19
    %s29 = scalar_select %p26, %s28, %s19
    %p30 = scmp.ge.s32.totalorder %s29, 2
    %s31 = scalar_select %p30, 0, %s29
    %s32 = sadd.s32 %s19, %s20
    %s33 = sadd.s32 %s31, %s27
    %s34 = ssub.s32 %s32, %s33
    %p35 = scmp.eq.s32.totalorder %s34, 0
    %s37 = sadd.s32 %s36, 1
    %s38 = scalar_select %p35, %s36, %s37
    %p41 = pneg %p35
    %p42 = scmp.eq.s32.totalorder %s12, 1
    %p43 = por %p41, %p42
    %p44 = scmp.ne.s32.totalorder %s36, %s39
    %p45 = scmp.eq.s32.totalorder %s12, 0
    %p46 = por %p44, %p45
    %p47 = scmp.ne.s32.totalorder %s36, %s39
    %p48 = scmp.eq.s32.totalorder %s17, 1
    %p49 = por %p47, %p48
    %p50 = scmp.ne.s32.totalorder %s39, %s40
    %p51 = scmp.eq.s32.totalorder %s17, 0
    %p52 = por %p50, %p51
    %p53 = scmp.ne.s32.totalorder %s39, %s40
    %p54 = scmp.eq.s32.totalorder %s18, 1
    %p55 = por %p53, %p54
    %p57 = scmp.ne.s32.totalorder %s40, %s56
    %p58 = scmp.eq.s32.totalorder %s18, 0
    %p59 = por %p57, %p58
    %s61 = sadd.s32 %s60, 1
    %p64 = scmp.eq.s32.totalorder %s12, 1
    %p65 = scmp.ne.s32.totalorder %s60, %s62
    %p66 = scmp.eq.s32.totalorder %s12, 0
    %p67 = por %p65, %p66
    %p68 = scmp.ne.s32.totalorder %s60, %s62
    %p69 = scmp.eq.s32.totalorder %s17, 1
    %p70 = por %p68, %p69
    %p71 = scmp.ne.s32.totalorder %s62, %s63
    %p72 = scmp.eq.s32.totalorder %s17, 0
    %p73 = por %p71, %p72
    %p74 = scmp.ne.s32.totalorder %s62, %s63
    %p75 = scmp.eq.s32.totalorder %s18, 1
    %p76 = por %p74, %p75
    %p78 = scmp.ne.s32.totalorder %s63, %s77
    %p79 = scmp.eq.s32.totalorder %s18, 0
    %p80 = por %p78, %p79
    %s82 = sadd.s32 %s81, 1
    %p85 = scmp.eq.s32.totalorder %s12, 1
    %p86 = scmp.ne.s32.totalorder %s81, %s83
    %p87 = scmp.eq.s32.totalorder %s12, 0
    %p88 = por %p86, %p87
    %p89 = scmp.ne.s32.totalorder %s81, %s83
    %p90 = scmp.eq.s32.totalorder %s17, 1
    %p91 = por %p89, %p90
    %p92 = scmp.ne.s32.totalorder %s83, %s84
    %p93 = scmp.eq.s32.totalorder %s17, 0
    %p94 = por %p92, %p93
    %p95 = scmp.ne.s32.totalorder %s83, %s84
    %p96 = scmp.eq.s32.totalorder %s18, 1
    %p97 = por %p95, %p96
    %p99 = scmp.ne.s32.totalorder %s84, %s98
    %p100 = scmp.eq.s32.totalorder %s18, 0
    %p101 = por %p99, %p100
    %s102 = sadd.s32 %s19, %s20
    %s103 = sadd.s32 %s31, %s27
    %s104 = ssub.s32 %s102, %s103
    %p105 = scmp.eq.s32.totalorder %s104, 0
    %s107 = sadd.s32 %s106, 1
    %s108 = scalar_select %p105, %s106, %s107
    %p111 = pneg %p105
    %p112 = scmp.eq.s32.totalorder %s12, 1
    %p113 = por %p111, %p112
    %p114 = scmp.ne.s32.totalorder %s106, %s109
    %p115 = scmp.eq.s32.totalorder %s12, 0
    %p116 = por %p114, %p115
    %p117 = scmp.ne.s32.totalorder %s106, %s109
    %p118 = scmp.eq.s32.totalorder %s17, 1
    %p119 = por %p117, %p118
    %p120 = scmp.ne.s32.totalorder %s109, %s110
    %p121 = scmp.eq.s32.totalorder %s17, 0
    %p122 = por %p120, %p121
    %p123 = scmp.ne.s32.totalorder %s109, %s110
    %p124 = scmp.eq.s32.totalorder %s18, 1
    %p125 = por %p123, %p124
    %p127 = scmp.ne.s32.totalorder %s110, %s126
    %p128 = scmp.eq.s32.totalorder %s18, 0
    %p129 = por %p127, %p128
    %s130 = ssub.s32 %s19, %s31
    %p131 = scmp.eq.s32.totalorder %s130, 0
    %s133 = sadd.s32 %s132, 1
    %s134 = scalar_select %p131, %s132, %s133
    %p137 = pneg %p131
    %p138 = scmp.eq.s32.totalorder %s12, 1
    %p139 = por %p137, %p138
    %p140 = scmp.ne.s32.totalorder %s132, %s135
    %p141 = scmp.eq.s32.totalorder %s12, 0
    %p142 = por %p140, %p141
    %p143 = scmp.ne.s32.totalorder %s132, %s135
    %p144 = scmp.eq.s32.totalorder %s17, 1
    %p145 = por %p143, %p144
    %p146 = scmp.ne.s32.totalorder %s135, %s136
    %p147 = scmp.eq.s32.totalorder %s17, 0
    %p148 = por %p146, %p147
    %p149 = scmp.ne.s32.totalorder %s135, %s136
    %p150 = scmp.eq.s32.totalorder %s18, 1
    %p151 = por %p149, %p150
    %p153 = scmp.ne.s32.totalorder %s136, %s152
    %p154 = scmp.eq.s32.totalorder %s18, 0
    %p155 = por %p153, %p154
    %s156 = ssub.s32 %s19, %s31
    %p157 = scmp.eq.s32.totalorder %s156, 0
    %s159 = sadd.s32 %s158, 1
    %s160 = scalar_select %p157, %s158, %s159
    %p163 = pneg %p157
    %p164 = scmp.eq.s32.totalorder %s12, 1
    %p165 = por %p163, %p164
    %p166 = scmp.ne.s32.totalorder %s158, %s161
    %p167 = scmp.eq.s32.totalorder %s12, 0
    %p168 = por %p166, %p167
    %p169 = scmp.ne.s32.totalorder %s158, %s161
    %p170 = scmp.eq.s32.totalorder %s17, 1
    %p171 = por %p169, %p170
    %p172 = scmp.ne.s32.totalorder %s161, %s162
    %p173 = scmp.eq.s32.totalorder %s17, 0
    %p174 = por %p172, %p173
    %p175 = scmp.ne.s32.totalorder %s161, %s162
    %p176 = scmp.eq.s32.totalorder %s18, 1
    %p177 = por %p175, %p176
    %p179 = scmp.ne.s32.totalorder %s162, %s178
    %p180 = scmp.eq.s32.totalorder %s18, 0
    %p181 = por %p179, %p180
    %p182 = scmp.le.s32.totalorder 1, %s12
    %p183 = scmp.lt.s32.totalorder %s12, 3
    %p184 = pnand %p182, %p183
    %p185 = pneg %p184
    // Predicated region
    $region9: #{downsample_block.2} parent=5 // pred_check
      _
    $region10: #{downsample_block.2} parent=5 // pred_check_branch
      %187 = sbr.rel (%p184) target = $region12
    $region11: #{downsample_block.2} parent=5 // pred_region
      %s188 = ssub.s32 %s12, 1
      // Predicated region
      $region13: #{downsample_block.2} parent=11 // pred_check
        %p189 = pneg %p73
      $region14: #{downsample_block.2} parent=11 // pred_check_branch
        %191 = sbr.rel (%p189) target = $region16
      $region15: #{downsample_block.2} parent=11 // pred_region
        _
      $region16: #{downsample_block.2} parent=11 // pred_fallthru
        _
      // Predicated region
      $region17: #{downsample_block.2} parent=11 // pred_check
        %p192 = pneg %p94
      $region18: #{downsample_block.2} parent=11 // pred_check_branch
        %194 = sbr.rel (%p192) target = $region20
      $region19: #{downsample_block.2} parent=11 // pred_region
        _
      $region20: #{downsample_block.2} parent=11 // pred_fallthru
        _
    $region12: #{downsample_block.2} parent=5 // pred_fallthru
      _
    %p195 = scmp.lt.s32.totalorder %s12, 2
    // Predicated region
    $region21: #{downsample_block.2} parent=5 // pred_check
      %p196 = pneg %p195
    $region22: #{downsample_block.2} parent=5 // pred_check_branch
      %198 = sbr.rel (%p196) target = $region24
    $region23: #{downsample_block.2} parent=5 // pred_region
      // Predicated region
      $region25: #{downsample_block.2} parent=23 // pred_check
        %p199 = pneg %p46
      $region26: #{downsample_block.2} parent=23 // pred_check_branch
        %201 = sbr.rel (%p199) target = $region28
      $region27: #{downsample_block.2} parent=23 // pred_region
        %s202 = sadd.s32 %s19, %s20
        %p203 = scmp.lt.s32.totalorder %s202, 1
        %s204 = scalar_select %p203, %s202, 1
        %s205 = smul.addr %s204, 19
        %s206 = smul.addr %s205, 4
        %s207 = scalar_lea.vmem %s0, %s206
        %s208 = sadd.s32 %s19, %s20
      $region28: #{downsample_block.2} parent=23 // pred_fallthru
        _
    $region24: #{downsample_block.2} parent=5 // pred_fallthru
      _
    %p209 = scmp.le.s32.totalorder 1, %s12
    %p210 = scmp.lt.s32.totalorder %s12, 3
    %p211 = pnand %p209, %p210
    %p212 = pneg %p211
    // Predicated region
    $region29: #{downsample_block.2} parent=5 // pred_check
      _
    $region30: #{downsample_block.2} parent=5 // pred_check_branch
      %214 = sbr.rel (%p211) target = $region32
    $region31: #{downsample_block.2} parent=5 // pred_region
      %s215 = ssub.s32 %s12, 1
      %s216 = sadd.s32 %s21, %s22
      %p217 = scmp.lt.s32.totalorder %s216, 1
      %s218 = scalar_select %p217, %s216, 1
      %s219 = smul.addr %s218, 19
      %s220 = smul.addr %s219, 4
      %s221 = scalar_lea.vmem %s0, %s220
      %p222 = pneg %p52
      %p223 = pneg %p49
      %p224 = pneg %p73
      %p225 = pneg %p70
      %p226 = pneg %p94
      %p227 = pneg %p91
      %p228 = pneg %p122
      %p229 = pneg %p119
      %s230 = sadd.s32 %s21, %s22
      %p231 = scmp.lt.s32.totalorder %s230, 1
      %s232 = scalar_select %p231, %s230, 1
      %s233 = smul.addr %s232, 4
      %s234 = scalar_lea.vmem %s3, %s233
      %p235 = pneg %p148
      %p236 = pneg %p145
      %p237 = scmp.lt.s32.totalorder %s21, 1
      %s238 = scalar_select %p237, %s21, 1
      %s239 = smul.addr %s238, 8
      %s240 = scalar_lea.vmem %s4, %s239
      %p241 = pneg %p174
      %p242 = pneg %p171
      %p243 = scmp.lt.s32.totalorder %s21, 1
      %s244 = scalar_select %p243, %s21, 1
      %s245 = smul.addr %s244, 8
      %s246 = scalar_lea.vmem %s5, %s245
      %s247 = sadd.s32 %s21, %s22
      %p248 = scmp.lt.s32.totalorder %s247, 1
      %s249 = scalar_select %p248, %s247, 1
      %s250 = smul.addr %s249, 19
      %s251 = smul.addr %s250, 4
      %s252 = scalar_lea.vmem %s0, %s251
      %s253 = sadd.s32 %s21, %s22
      %s254 = sadd.s32 %s21, %s22
      %p255 = scmp.lt.s32.totalorder %s254, 1
      %s256 = scalar_select %p255, %s254, 1
      %s257 = smul.addr %s256, 4
      %s258 = scalar_lea.vmem %s3, %s257
      %s259 = sadd.s32 %s21, %s22
      %p260 = scmp.lt.s32.totalorder %s21, 1
      %s261 = scalar_select %p260, %s21, 1
      %s262 = smul.addr %s261, 8
      %s263 = scalar_lea.vmem %s4, %s262
      %p264 = scmp.lt.s32.totalorder %s21, 1
      %s265 = scalar_select %p264, %s21, 1
      %s266 = smul.addr %s265, 8
      %s267 = scalar_lea.vmem %s5, %s266
      %v268 = vld [vmem:[%s252] sm:$0xf]
      %v269 = vld [vmem:[%s252 + $0x4] sm:$0xf]
      %v270 = vld [vmem:[%s252 + $0x8] sm:$0xf]
      %v271 = vld [vmem:[%s252 + $0xc] sm:$0xf]
      %v272 = vld [vmem:[%s252 + $0x10] sm:$0xf]
      %v273 = vld [vmem:[%s252 + $0x14] sm:$0xf]
      %v274 = vld [vmem:[%s252 + $0x18] sm:$0xf]
      %v275 = vld [vmem:[%s252 + $0x1c] sm:$0xf]
      %v276 = vld [vmem:[%s252 + $0x20] sm:$0xf]
      %v277 = vld [vmem:[%s252 + $0x24] sm:$0xf]
      %v278 = vld [vmem:[%s252 + $0x28] sm:$0xf]
      %v279 = vld [vmem:[%s252 + $0x2c] sm:$0xf]
      %v280 = vld [vmem:[%s252 + $0x30] sm:$0xf]
      %v281 = vld [vmem:[%s252 + $0x34] sm:$0xf]
      %v282 = vld [vmem:[%s252 + $0x38] sm:$0xf]
      %v283 = vld [vmem:[%s252 + $0x3c] sm:$0xf]
      %v284 = vld [vmem:[%s1] sm:$0xf]
      %v285 = vld [vmem:[%s252 + $0x40] sm:$0x1]
      %s286 = scalar_lea.vmem %s1, 4
      %v287 = vld [vmem:[%s286] sm:$0xf]
      %v305 = vunpack.c.l.b16 %v268
      %v306 = vunpack.c.l.b16 %v269
      %v307 = vunpack.c.l.b16 %v270
      %v308 = vunpack.c.l.b16 %v271
      %v309 = vunpack.c.l.b16 %v272
      %v310 = vunpack.c.l.b16 %v273
      %v311 = vunpack.c.l.b16 %v274
      %v312 = vunpack.c.l.b16 %v275
      %v313 = vunpack.c.l.b16 %v276
      %v314 = vunpack.c.l.b16 %v277
      %v315 = vunpack.c.l.b16 %v278
      %v316 = vunpack.c.l.b16 %v279
      %v317 = vunpack.c.l.b16 %v280
      %v318 = vunpack.c.l.b16 %v281
      %v319 = vunpack.c.l.b16 %v282
      %v320 = vunpack.c.l.b16 %v283
      %v321 = vunpack.c.l.b16 %v285
      %v322 = vpack.c.b16 %v306, %v305
      %v323 = vpack.c.b16 %v308, %v307
      %v324 = vpack.c.b16 %v310, %v309
      %v325 = vpack.c.b16 %v312, %v311
      %v326 = vpack.c.b16 %v314, %v313
      %v327 = vpack.c.b16 %v316, %v315
      %v328 = vpack.c.b16 %v318, %v317
      %v329 = vpack.c.b16 %v320, %v319
      %v330 = vpack.c.b16 %v321, %v321
      %vm331 = vsmask.f32 7424
      %v333 = vshrl.u32 %v322, 16
      %v335 = vshll.u32 %v322, 16
      %v337 = vrot.slane %v335, 1
      %v338 = vor.u32 %v333, %v337
      %v340 = vshll.u32 %v323, 16
      %v342 = vrot.slane %v340, 1
      %v343 = vsel %vm331, %v338, %v342
      %v344 = vshrl.u32 %v323, 16
      %v346 = vor.u32 %v344, %v342
      %v348 = vshll.u32 %v324, 16
      %v350 = vrot.slane %v348, 1
      %v351 = vsel %vm331, %v346, %v350
      %v352 = vshrl.u32 %v324, 16
      %v354 = vor.u32 %v352, %v350
      %v356 = vshll.u32 %v325, 16
      %v358 = vrot.slane %v356, 1
      %v359 = vsel %vm331, %v354, %v358
      %v360 = vshrl.u32 %v325, 16
      %v362 = vor.u32 %v360, %v358
      %v364 = vshll.u32 %v326, 16
      %v366 = vrot.slane %v364, 1
      %v367 = vsel %vm331, %v362, %v366
      %v368 = vshrl.u32 %v326, 16
      %v370 = vor.u32 %v368, %v366
      %v372 = vshll.u32 %v327, 16
      %v374 = vrot.slane %v372, 1
      %v375 = vsel %vm331, %v370, %v374
      %v376 = vshrl.u32 %v327, 16
      %v378 = vor.u32 %v376, %v374
      %v380 = vshll.u32 %v328, 16
      %v382 = vrot.slane %v380, 1
      %v383 = vsel %vm331, %v378, %v382
      %v384 = vshrl.u32 %v328, 16
      %v386 = vor.u32 %v384, %v382
      %v388 = vshll.u32 %v329, 16
      %v390 = vrot.slane %v388, 1
      %v391 = vsel %vm331, %v386, %v390
      %v392 = vshrl.u32 %v329, 16
      %v394 = vor.u32 %v392, %v390
      %v396 = vshll.u32 %v330, 16
      %v398 = vrot.slane %v396, 1
      %v399 = vsel %vm331, %v394, %v398
      %vm400 = vcmask 130048
      %v402 = vsel %vm400, %v287, 0
      %v405 = vsel %vm400, %v343, 0
      %v408 = vsel %vm400, %v351, 0
      %v411 = vsel %vm400, %v359, 0
      %v414 = vsel %vm400, %v367, 0
      %v417 = vsel %vm400, %v375, 0
      %v420 = vsel %vm400, %v383, 0
      %v423 = vsel %vm400, %v391, 0
      %v426 = vsel %vm400, %v399, 0
      %428 = vmatpush.bf16.xpose.msra.mxu0 %v426
      %429 = vmatpush.bf16.xpose.msra.mxu0 %v423
      %430 = vmatpush.bf16.xpose.msra.mxu0 %v420
      %431 = vmatpush.bf16.xpose.msra.mxu0 %v417
      %432 = vmatpush.bf16.xpose.msra.mxu0 %v414
      %433 = vmatpush.bf16.xpose.msra.mxu0 %v411
      %434 = vmatpush.bf16.xpose.msra.mxu0 %v408
      %435 = vmatpush.bf16.xpose.msra.mxu0 %v405
      %436 = vmatmul.bf16.gmra.mxu0 %v402
      %v437 = vpop.f32.mrf.mxu0
      %v438 = vadd.f32 0.0, %v437
      %v439 = vpop.f32.mrf.mxu0
      %440 = vdwg.mxu0
      %v442 = vsel %vm400, %v284, 0
      %v444 = vsel %vm400, %v322, 0
      %v446 = vsel %vm400, %v323, 0
      %v448 = vsel %vm400, %v324, 0
      %v450 = vsel %vm400, %v325, 0
      %v452 = vsel %vm400, %v326, 0
      %v454 = vsel %vm400, %v327, 0
      %v456 = vsel %vm400, %v328, 0
      %v458 = vsel %vm400, %v329, 0
      %460 = vmatpush.bf16.xpose.msra.mxu0 %v458
      %461 = vmatpush.bf16.xpose.msra.mxu0 %v456
      %462 = vmatpush.bf16.xpose.msra.mxu0 %v454
      %463 = vmatpush.bf16.xpose.msra.mxu0 %v452
      %464 = vmatpush.bf16.xpose.msra.mxu0 %v450
      %465 = vmatpush.bf16.xpose.msra.mxu0 %v448
      %466 = vmatpush.bf16.xpose.msra.mxu0 %v446
      %467 = vmatpush.bf16.xpose.msra.mxu0 %v444
      %468 = vmatmul.bf16.gmra.mxu0 %v442
      %v469 = vpop.f32.mrf.mxu0
      %v470 = vadd.f32 %v438, %v469
      %v471 = vpop.f32.mrf.mxu0
      %472 = vdwg.mxu0
      %v473 = vld [vmem:[%s252 + $0x4] sm:$0xf]
      %v474 = vld [vmem:[%s252 + $0x8] sm:$0xf]
      %v475 = vld [vmem:[%s252 + $0xc] sm:$0xf]
      %v476 = vld [vmem:[%s252 + $0x10] sm:$0xf]
      %v477 = vld [vmem:[%s252 + $0x14] sm:$0xf]
      %v478 = vld [vmem:[%s252 + $0x18] sm:$0xf]
      %v479 = vld [vmem:[%s252 + $0x1c] sm:$0xf]
      %v480 = vld [vmem:[%s252 + $0x20] sm:$0xf]
      %v481 = vld [vmem:[%s252 + $0x24] sm:$0xf]
      %v482 = vld [vmem:[%s252 + $0x28] sm:$0xf]
      %v483 = vld [vmem:[%s252 + $0x2c] sm:$0xf]
      %v484 = vld [vmem:[%s252 + $0x30] sm:$0xf]
      %v485 = vld [vmem:[%s252 + $0x34] sm:$0xf]
      %v486 = vld [vmem:[%s252 + $0x38] sm:$0xf]
      %v487 = vld [vmem:[%s252 + $0x3c] sm:$0xf]
      %v488 = vld [vmem:[%s252 + $0x40] sm:$0xf]
      %v489 = vld [vmem:[%s252 + $0x44] sm:$0x1]
      %s490 = scalar_lea.vmem %s1, 8
      %v491 = vld [vmem:[%s490] sm:$0xf]
      %v509 = vunpack.c.l.b16 %v473
      %v510 = vunpack.c.l.b16 %v474
      %v511 = vunpack.c.l.b16 %v475
      %v512 = vunpack.c.l.b16 %v476
      %v513 = vunpack.c.l.b16 %v477
      %v514 = vunpack.c.l.b16 %v478
      %v515 = vunpack.c.l.b16 %v479
      %v516 = vunpack.c.l.b16 %v480
      %v517 = vunpack.c.l.b16 %v481
      %v518 = vunpack.c.l.b16 %v482
      %v519 = vunpack.c.l.b16 %v483
      %v520 = vunpack.c.l.b16 %v484
      %v521 = vunpack.c.l.b16 %v485
      %v522 = vunpack.c.l.b16 %v486
      %v523 = vunpack.c.l.b16 %v487
      %v524 = vunpack.c.l.b16 %v488
      %v525 = vunpack.c.l.b16 %v489
      %v526 = vpack.c.b16 %v510, %v509
      %v527 = vpack.c.b16 %v512, %v511
      %v528 = vpack.c.b16 %v514, %v513
      %v529 = vpack.c.b16 %v516, %v515
      %v530 = vpack.c.b16 %v518, %v517
      %v531 = vpack.c.b16 %v520, %v519
      %v532 = vpack.c.b16 %v522, %v521
      %v533 = vpack.c.b16 %v524, %v523
      %v534 = vpack.c.b16 %v525, %v525
      %v536 = vshrl.u32 %v526, 16
      %v538 = vshll.u32 %v526, 16
      %v540 = vrot.slane %v538, 1
      %v541 = vor.u32 %v536, %v540
      %v543 = vshll.u32 %v527, 16
      %v545 = vrot.slane %v543, 1
      %v546 = vsel %vm331, %v541, %v545
      %v547 = vshrl.u32 %v527, 16
      %v549 = vor.u32 %v547, %v545
      %v551 = vshll.u32 %v528, 16
      %v553 = vrot.slane %v551, 1
      %v554 = vsel %vm331, %v549, %v553
      %v555 = vshrl.u32 %v528, 16
      %v557 = vor.u32 %v555, %v553
      %v559 = vshll.u32 %v529, 16
      %v561 = vrot.slane %v559, 1
      %v562 = vsel %vm331, %v557, %v561
      %v563 = vshrl.u32 %v529, 16
      %v565 = vor.u32 %v563, %v561
      %v567 = vshll.u32 %v530, 16
      %v569 = vrot.slane %v567, 1
      %v570 = vsel %vm331, %v565, %v569
      %v571 = vshrl.u32 %v530, 16
      %v573 = vor.u32 %v571, %v569
      %v575 = vshll.u32 %v531, 16
      %v577 = vrot.slane %v575, 1
      %v578 = vsel %vm331, %v573, %v577
      %v579 = vshrl.u32 %v531, 16
      %v581 = vor.u32 %v579, %v577
      %v583 = vshll.u32 %v532, 16
      %v585 = vrot.slane %v583, 1
      %v586 = vsel %vm331, %v581, %v585
      %v587 = vshrl.u32 %v532, 16
      %v589 = vor.u32 %v587, %v585
      %v591 = vshll.u32 %v533, 16
      %v593 = vrot.slane %v591, 1
      %v594 = vsel %vm331, %v589, %v593
      %v595 = vshrl.u32 %v533, 16
      %v597 = vor.u32 %v595, %v593
      %v599 = vshll.u32 %v534, 16
      %v601 = vrot.slane %v599, 1
      %v602 = vsel %vm331, %v597, %v601
      %v604 = vsel %vm400, %v491, 0
      %v607 = vsel %vm400, %v546, 0
      %v610 = vsel %vm400, %v554, 0
      %v613 = vsel %vm400, %v562, 0
      %v616 = vsel %vm400, %v570, 0
      %v619 = vsel %vm400, %v578, 0
      %v622 = vsel %vm400, %v586, 0
      %v625 = vsel %vm400, %v594, 0
      %v628 = vsel %vm400, %v602, 0
      %630 = vmatpush.bf16.xpose.msra.mxu0 %v628
      %631 = vmatpush.bf16.xpose.msra.mxu0 %v625
      %632 = vmatpush.bf16.xpose.msra.mxu0 %v622
      %633 = vmatpush.bf16.xpose.msra.mxu0 %v619
      %634 = vmatpush.bf16.xpose.msra.mxu0 %v616
      %635 = vmatpush.bf16.xpose.msra.mxu0 %v613
      %636 = vmatpush.bf16.xpose.msra.mxu0 %v610
      %637 = vmatpush.bf16.xpose.msra.mxu0 %v607
      %638 = vmatmul.bf16.gmra.mxu0 %v604
      %v639 = vpop.f32.mrf.mxu0
      %v640 = vadd.f32 0.0, %v639
      %v641 = vpop.f32.mrf.mxu0
      %642 = vdwg.mxu0
      %v643 = vadd.f32 %v470, %v640
      %v644 = vld [vmem:[%s252 + $0x4] sm:$0xe]
      %s645 = scalar_lea.vmem %s1, 12
      %v646 = vld [vmem:[%s645] sm:$0xf]
      %v648 = vunpack.c.l.b16 %v644
      %v649 = vpack.c.b16 %v510, %v648
      %vm650 = vcmask 1046528
      %v651 = vrot.slane %v649, 1
      %v652 = vrot.slane %v527, 1
      %v653 = vsel %vm650, %v651, %v652
      %v654 = vrot.slane %v528, 1
      %v655 = vsel %vm650, %v652, %v654
      %v656 = vrot.slane %v529, 1
      %v657 = vsel %vm650, %v654, %v656
      %v658 = vrot.slane %v530, 1
      %v659 = vsel %vm650, %v656, %v658
      %v660 = vrot.slane %v531, 1
      %v661 = vsel %vm650, %v658, %v660
      %v662 = vrot.slane %v532, 1
      %v663 = vsel %vm650, %v660, %v662
      %v664 = vrot.slane %v533, 1
      %v665 = vsel %vm650, %v662, %v664
      %v666 = vrot.slane %v534, 1
      %v667 = vsel %vm650, %v664, %v666
      %v669 = vsel %vm400, %v646, 0
      %v672 = vsel %vm400, %v653, 0
      %v675 = vsel %vm400, %v655, 0
      %v678 = vsel %vm400, %v657, 0
      %v681 = vsel %vm400, %v659, 0
      %v684 = vsel %vm400, %v661, 0
      %v687 = vsel %vm400, %v663, 0
      %v690 = vsel %vm400, %v665, 0
      %v693 = vsel %vm400, %v667, 0
      %695 = vmatpush.bf16.xpose.msra.mxu0 %v693
      %696 = vmatpush.bf16.xpose.msra.mxu0 %v690
      %697 = vmatpush.bf16.xpose.msra.mxu0 %v687
      %698 = vmatpush.bf16.xpose.msra.mxu0 %v684
      %699 = vmatpush.bf16.xpose.msra.mxu0 %v681
      %700 = vmatpush.bf16.xpose.msra.mxu0 %v678
      %701 = vmatpush.bf16.xpose.msra.mxu0 %v675
      %702 = vmatpush.bf16.xpose.msra.mxu0 %v672
      %703 = vmatmul.bf16.gmra.mxu0 %v669
      %v704 = vpop.f32.mrf.mxu0
      %v705 = vadd.f32 0.0, %v704
      %v706 = vpop.f32.mrf.mxu0
      %707 = vdwg.mxu0
      %v708 = vadd.f32 %v643, %v705
      %v709 = vpack.c.bf16 %v708, %v708
      %710 = vst [vmem:[%s258] sm:$0xf] %v709
      %v711 = vld [vmem:[%s2] sm:$0x1]
      %v713 = vperm.slane %v711, 0
      %v715 = vmul.f32 %v708, %v713
      %p716 = scmp.eq.s32.totalorder %s22, 0
      // Predicated region
      $region33: #{downsample_block.2} parent=31 // pred_check
        %p717 = pneg %p716
      $region34: #{downsample_block.2} parent=31 // pred_check_branch
        %719 = sbr.rel (%p717) target = $region36
      $region35: #{downsample_block.2} parent=31 // pred_region
        %vm720 = vcmask 7168
        %721 = vst.msk [vmem:[#allocation2] sm:$0xff] %vm720, 0.0
        %722 = vst.msk [vmem:[#allocation3] sm:$0xff] %vm720, 0.0
      $region36: #{downsample_block.2} parent=31 // pred_fallthru
        _
      %v723 = vld [vmem:[#allocation2] sm:$0xff]
      %724 = vadd.xlane.f32.xlu0 %v715
      %v725 = vpop.xlane.xlu0 %724
      %v726 = vadd.f32 %v723, %v725
      %vm727 = vcmask 7168
      %728 = vst.msk [vmem:[#allocation2] sm:$0xff] %vm727, %v726
      %v729 = vld [vmem:[#allocation3] sm:$0xff]
      %v730 = vmul.f32 %v715, %v715
      %731 = vadd.xlane.f32.xlu0 %v730
      %v732 = vpop.xlane.xlu0 %731
      %v733 = vadd.f32 %v729, %v732
      %734 = vst.msk [vmem:[#allocation3] sm:$0xff] %vm727, %v733
      // Predicated region
      $region37: #{downsample_block.2} parent=31 // pred_check
        %p735 = pneg %p716
      $region38: #{downsample_block.2} parent=31 // pred_check_branch
        %737 = sbr.rel (%p735) target = $region40
      $region39: #{downsample_block.2} parent=31 // pred_region
        %v738 = vld [vmem:[#allocation2] sm:$0xff]
        %739 = vst.msk [vmem:[%s263] sm:$0xff] %vm727, %v738
        %v740 = vld [vmem:[#allocation3] sm:$0xff]
        %741 = vst.msk [vmem:[%s267] sm:$0xff] %vm727, %v740
      $region40: #{downsample_block.2} parent=31 // pred_fallthru
        _
      %s742 = sadd.s32 %s21, %s22
      %p743 = scmp.lt.s32.totalorder %s742, 1
      %s744 = scalar_select %p743, %s742, 1
      %s745 = smul.addr %s744, 4
      %s746 = scalar_lea.vmem %s3, %s745
      %p747 = scmp.lt.s32.totalorder %s21, 1
      %s748 = scalar_select %p747, %s21, 1
      %s749 = smul.addr %s748, 8
      %s750 = scalar_lea.vmem %s4, %s749
      %p751 = scmp.lt.s32.totalorder %s21, 1
      %s752 = scalar_select %p751, %s21, 1
      %s753 = smul.addr %s752, 8
      %s754 = scalar_lea.vmem %s5, %s753
      // Predicated region
      $region41: #{downsample_block.2} parent=31 // pred_check
        %p755 = pneg %p119
      $region42: #{downsample_block.2} parent=31 // pred_check_branch
        %757 = sbr.rel (%p755) target = $region44
      $region43: #{downsample_block.2} parent=31 // pred_region
        %s758 = sadd.s32 %s21, %s22
      $region44: #{downsample_block.2} parent=31 // pred_fallthru
        _
      // Predicated region
      $region45: #{downsample_block.2} parent=31 // pred_check
        %p759 = pneg %p145
      $region46: #{downsample_block.2} parent=31 // pred_check_branch
        %761 = sbr.rel (%p759) target = $region48
      $region47: #{downsample_block.2} parent=31 // pred_region
        _
      $region48: #{downsample_block.2} parent=31 // pred_fallthru
        _
      // Predicated region
      $region49: #{downsample_block.2} parent=31 // pred_check
        %p762 = pneg %p171
      $region50: #{downsample_block.2} parent=31 // pred_check_branch
        %764 = sbr.rel (%p762) target = $region52
      $region51: #{downsample_block.2} parent=31 // pred_region
        _
      $region52: #{downsample_block.2} parent=31 // pred_fallthru
        _
    $region32: #{downsample_block.2} parent=5 // pred_fallthru
      _
    %p765 = scmp.le.s32.totalorder 2, %s12
    // Predicated region
    $region53: #{downsample_block.2} parent=5 // pred_check
      %p766 = pneg %p765
    $region54: #{downsample_block.2} parent=5 // pred_check_branch
      %768 = sbr.rel (%p766) target = $region56
    $region55: #{downsample_block.2} parent=5 // pred_region
      %s769 = ssub.s32 %s12, 2
      // Predicated region
      $region57: #{downsample_block.2} parent=55 // pred_check
        %p770 = pneg %p125
      $region58: #{downsample_block.2} parent=55 // pred_check_branch
        %772 = sbr.rel (%p770) target = $region60
      $region59: #{downsample_block.2} parent=55 // pred_region
        %s773 = sadd.s32 %s23, %s24
        %p774 = scmp.lt.s32.totalorder %s773, 1
        %s775 = scalar_select %p774, %s773, 1
        %s776 = smul.addr %s775, 4
        %s777 = scalar_lea.vmem %s3, %s776
      $region60: #{downsample_block.2} parent=55 // pred_fallthru
        _
      // Predicated region
      $region61: #{downsample_block.2} parent=55 // pred_check
        %p778 = pneg %p151
      $region62: #{downsample_block.2} parent=55 // pred_check_branch
        %780 = sbr.rel (%p778) target = $region64
      $region63: #{downsample_block.2} parent=55 // pred_region
        %p781 = scmp.lt.s32.totalorder %s23, 1
        %s782 = scalar_select %p781, %s23, 1
        %s783 = smul.addr %s782, 8
        %s784 = scalar_lea.vmem %s4, %s783
      $region64: #{downsample_block.2} parent=55 // pred_fallthru
        _
      // Predicated region
      $region65: #{downsample_block.2} parent=55 // pred_check
        %p785 = pneg %p177
      $region66: #{downsample_block.2} parent=55 // pred_check_branch
        %787 = sbr.rel (%p785) target = $region68
      $region67: #{downsample_block.2} parent=55 // pred_region
        %p788 = scmp.lt.s32.totalorder %s23, 1
        %s789 = scalar_select %p788, %s23, 1
        %s790 = smul.addr %s789, 8
        %s791 = scalar_lea.vmem %s5, %s790
      $region68: #{downsample_block.2} parent=55 // pred_fallthru
        _
    $region56: #{downsample_block.2} parent=5 // pred_fallthru
      _
  $region6: #{downsample_block.2} parent=0 // loop_footer
    %s16 = sadd.s32 1, %s12
  $region7: #{downsample_block.2} parent=0 // loop_footer_branch
    %11 = sbr.rel target = $region3
  $region8: #{downsample_block.2} parent=0 // loop_exit
    _

</llo_original>
